<compile_context>
chip_gen: v7x
topology: tpu7x:2x2x1
jax: 0.10.0
libtpu: 0.0.40
codegen_flags: <defaults>
</compile_context>

<pallas_src>
import jax
import jax.numpy as jnp
from jax.experimental import pallas as pl
from jax.experimental.pallas import tpu as pltpu


HEAD_PAD = 8   # pair (4) + senti (2) head rows, padded to 8 sublanes


# ---------------------------------------------------------------------------
# Fused kernel (single invocation, whole batch):
#   txt_cls = emb[ids]                                  (B, H)   in-kernel gather
#   cls     = tanh(txt_cls + mean_r(img) @ W_img)       (B, H)
#   out     = cls @ W_head^T + b_head                   (B, 8)   pair rows 0..3, senti 4..5
# ---------------------------------------------------------------------------
def _bert_rel_kernel(ids_ref, emb_ref, img_ref, wimg_ref, whead_ref, bhead_ref,
                     o_ref):
    """Shapes:
      ids_ref   : SMEM (B,)       int32  CLS token ids (text[:, 0])
      emb_ref   : VMEM (V, H)     f32    embedding table
      img_ref   : VMEM (B, R, F)  f32    region features (F = 64, NOT padded)
      wimg_ref  : VMEM (F, H)     bf16   image projection weight
      whead_ref : VMEM (8, H)     bf16   fused pair+senti head weights (rows >= 6 zero)
      bhead_ref : VMEM (1, 8)     f32    fused bias
      o_ref     : VMEM (B, 8)     f32
    """
    b_sz = img_ref.shape[0]
    r = img_ref.shape[1]

    # CLS text rows gathered in-kernel (dynamic sublane slice per batch row).
    rows = [emb_ref[pl.ds(ids_ref[b], 1), :] for b in range(b_sz)]     # (1, H) each
    txt_cls = jnp.concatenate(rows, axis=0)                            # (B, H) f32

    # Mean over regions BEFORE the projection (mean and matmul commute).
    img_mean = jnp.sum(img_ref[...], axis=1) * (1.0 / r)               # (B, F) f32
    img_pooled = jnp.dot(img_mean.astype(jnp.bfloat16), wimg_ref[...],
                         preferred_element_type=jnp.float32)           # (B, H) f32

    cls = jnp.tanh(txt_cls + img_pooled)                               # (B, H) f32

    # Both projection heads in one (B,H) x (8,H)^T contraction.
    y = jax.lax.dot_general(cls.astype(jnp.bfloat16), whead_ref[...],
                            dimension_numbers=(((1,), (1,)), ((), ())),
                            preferred_element_type=jnp.float32)        # (B, 8)
    o_ref[...] = y + bhead_ref[...]


def bert_rel_fused(ids, emb, img, w_img, w_head, b_head):
    """ids: (B,) i32; emb: (V,H) f32; img: (B,R,F) f32; w_img: (F,H) bf16;
    w_head: (8,H) bf16; b_head: (1,8) f32  ->  (B, 8) f32."""
    B = ids.shape[0]
    return pl.pallas_call(
        _bert_rel_kernel,
        out_shape=jax.ShapeDtypeStruct((B, HEAD_PAD), jnp.float32),
        in_specs=[
            pl.BlockSpec(memory_space=pltpu.MemorySpace.SMEM),   # ids
            pl.BlockSpec(memory_space=pltpu.MemorySpace.VMEM),   # emb
            pl.BlockSpec(memory_space=pltpu.MemorySpace.VMEM),   # img
            pl.BlockSpec(memory_space=pltpu.MemorySpace.VMEM),   # w_img
            pl.BlockSpec(memory_space=pltpu.MemorySpace.VMEM),   # w_head
            pl.BlockSpec(memory_space=pltpu.MemorySpace.VMEM),   # b_head
        ],
        out_specs=pl.BlockSpec(memory_space=pltpu.MemorySpace.VMEM),
    )(ids, emb, img, w_img, w_head, b_head)


# ---------------------------------------------------------------------------
# Module equivalents
# ---------------------------------------------------------------------------
class Params:
    def __init__(self, class_name="it"):
        self.class_name = class_name


class SyntheticVLBert:
    """Deterministic stand-in for the external `myvlbert` backbone.

    encoder(text, img)[:, 0, :] = tanh(emb[text[:, 0]] + mean_r(img) @ W_img)
    """

    def __init__(self, key, vocab=32, hidden=768, img_feat=64):
        k1, k2 = jax.random.split(key)
        self.hidden = hidden
        self.img_feat = img_feat
        self.emb = jax.random.normal(k1, (vocab, hidden), jnp.float32) * 0.02
        w = jax.random.normal(k2, (img_feat, hidden), jnp.float32) * 0.02
        # bf16 weight storage (MXU-native, f32 accumulation); keep F = 64 unpadded.
        self.w_img = w.astype(jnp.bfloat16)
        self.w_img_f32 = self.w_img.astype(jnp.float32)   # for the pure-JAX reference


class BertRelPallas:
    def __init__(self, params, myvlbert, key):
        self.params = params
        self.mybert = myvlbert
        k1, k2, k3, k4 = jax.random.split(key, 4)
        H = myvlbert.hidden
        # senti_preject: Linear(768 -> 2)
        self.senti_out = 2
        senti_w = jax.random.normal(k1, (self.senti_out, H), jnp.float32) * 0.02
        senti_b = jax.random.normal(k2, (self.senti_out,), jnp.float32) * 0.02
        # pair_preject: Linear(768 -> 4) if class_name == 'it' else (768 -> 2)
        self.pair_out = 4 if self.params.class_name == "it" else 2
        pair_w = jax.random.normal(k3, (self.pair_out, H), jnp.float32) * 0.02
        pair_b = jax.random.normal(k4, (self.pair_out,), jnp.float32) * 0.02
        # Fuse both heads into a single (8, H) slab (pair rows first, then senti),
        # padded with zero rows to 8 sublanes; built once at init.
        n = self.pair_out + self.senti_out
        w_head = jnp.zeros((HEAD_PAD, H), jnp.float32)
        w_head = w_head.at[: self.pair_out].set(pair_w)
        w_head = w_head.at[self.pair_out: n].set(senti_w)
        b_head = jnp.zeros((1, HEAD_PAD), jnp.float32)
        b_head = b_head.at[0, : self.pair_out].set(pair_b)
        b_head = b_head.at[0, self.pair_out: n].set(senti_b)
        self.w_head = w_head.astype(jnp.bfloat16)   # bf16 storage for the MXU
        self.b_head = b_head
        self.w_head_f32 = self.w_head.astype(jnp.float32)   # for the reference

    # ---- one pallas_call produces BOTH heads (pair cols 0..3, senti cols 4..5)
    def _fused_heads(self, text, img):
        ids = text[:, 0].astype(jnp.int32)                       # (B,)
        return bert_rel_fused(ids, self.mybert.emb, img.astype(jnp.float32),
                              self.mybert.w_img, self.w_head, self.b_head)

    def __call__(self, text, img, lens, masks, relation=None, mode="train",
                 indexs_list=None):
        out8 = self._fused_heads(text, img)                      # (B, 8)
        if relation is not None:
            out = out8[:, : self.pair_out]
        else:
            out = out8[:, self.pair_out: self.pair_out + self.senti_out]
        # match `preject(all_encoder_layers[:, :1, :])` -> (B, 1, O)
        return out[:, None, :]

    def forward_both(self, text, img, lens, masks):
        """Both heads from a single kernel launch (review item #6)."""
        out8 = self._fused_heads(text, img)                      # (B, 8)
        pair = out8[:, : self.pair_out][:, None, :]
        senti = out8[:, self.pair_out: self.pair_out + self.senti_out][:, None, :]
        return pair, senti


def _ref_forward(model, text, img, relation):
    """Pure-JAX f32 reference (uses the same, bf16-quantized, weight values)."""
    txt_cls = jnp.take(model.mybert.emb, text[:, 0], axis=0)              # (B, H)
    img_pooled = jnp.mean(img.astype(jnp.float32), axis=1) @ model.mybert.w_img_f32
    cls = jnp.tanh(txt_cls + img_pooled)
    if relation is not None:
        w = model.w_head_f32[: model.pair_out]
        b = model.b_head[0, : model.pair_out]
    else:
        w = model.w_head_f32[model.pair_out: model.pair_out + model.senti_out]
        b = model.b_head[0, model.pair_out: model.pair_out + model.senti_out]
    return (cls @ w.T + b)[:, None, :]


if __name__ == "__main__":
    key = jax.random.PRNGKey(0)
    k_text, k_img, k_bert, k_model = jax.random.split(key, 4)

    B, S, R, F = 2, 8, 4, 64
    text = jax.random.randint(k_text, (B, S), 0, 32, dtype=jnp.int32)
    img = jax.random.normal(k_img, (B, R, F), jnp.float32)
    lens = jnp.full((B,), S, jnp.int32)           # unused by forward (as in PyTorch)
    masks = jnp.ones((B, S), jnp.float32)         # unused by forward (as in PyTorch)
    relation = jnp.ones((B,), jnp.int32)          # not-None -> pair_preject branch

    params = Params(class_name="it")
    model = BertRelPallas(params, SyntheticVLBert(k_bert), k_model)

    # Fused path: ONE pallas_call yields both heads.
    pair_out, senti_out = model.forward_both(text, img, lens, masks)
    jax.block_until_ready(pair_out)
    jax.block_until_ready(senti_out)

    assert pair_out.shape == (B, 1, 4), pair_out.shape
    assert senti_out.shape == (B, 1, 2), senti_out.shape
    assert bool(jnp.all(jnp.isfinite(pair_out)))
    assert bool(jnp.all(jnp.isfinite(senti_out)))

    # Original forward semantics (`relation` selects the head) agree with the
    # fused-both path.
    pair_call = model(text, img, lens, masks, relation=relation)      # (B, 1, 4)
    senti_call = model(text, img, lens, masks, relation=None)         # (B, 1, 2)
    assert jnp.allclose(pair_call, pair_out)
    assert jnp.allclose(senti_call, senti_out)

    # Numerical check against the pure-JAX f32 reference (bf16 MXU operands ->
    # slightly looser tolerance than a pure-f32 kernel).
    ref_pair = _ref_forward(model, text, img, relation)
    ref_senti = _ref_forward(model, text, img, None)
    assert jnp.allclose(pair_out, ref_pair, atol=1e-2, rtol=1e-2)
    assert jnp.allclose(senti_out, ref_senti, atol=1e-2, rtol=1e-2)

    print("KERNEL_OK")
</pallas_src>

<mosaic_0001>
module attributes {stable_mosaic.version = 11 : i64} {
  func.func @_bert_rel_kernel(%arg0: memref<2xi32, #tpu.memory_space<smem>>, %arg1: memref<32x768xf32, #tpu.memory_space<vmem>>, %arg2: memref<2x4x64xf32, #tpu.memory_space<vmem>>, %arg3: memref<64x768xbf16, #tpu.memory_space<vmem>>, %arg4: memref<8x768xbf16, #tpu.memory_space<vmem>>, %arg5: memref<1x8xf32, #tpu.memory_space<vmem>>, %arg6: memref<2x8xf32, #tpu.memory_space<vmem>>) attributes {dimension_semantics = [], scalar_prefetch = 0 : i64, scratch_operands = 0 : i64, tpu.core_type = #tpu.core_type<tc>} {
    %c0 = arith.constant 0 : index
    %0 = memref.load %arg0[%c0] : memref<2xi32, #tpu.memory_space<smem>>
    %1 = arith.index_cast %0 : i32 to index
    %c0_0 = arith.constant 0 : index
    %2 = vector.load %arg1[%1, %c0_0] : memref<32x768xf32, #tpu.memory_space<vmem>>, vector<1x768xf32>
    %c1 = arith.constant 1 : index
    %3 = memref.load %arg0[%c1] : memref<2xi32, #tpu.memory_space<smem>>
    %4 = arith.index_cast %3 : i32 to index
    %c0_1 = arith.constant 0 : index
    %5 = vector.load %arg1[%4, %c0_1] : memref<32x768xf32, #tpu.memory_space<vmem>>, vector<1x768xf32>
    %6 = tpu.concatenate %2, %5 in 0 : vector<1x768xf32>, vector<1x768xf32> -> vector<2x768xf32>
    %c0_2 = arith.constant 0 : index
    %c0_3 = arith.constant 0 : index
    %c0_4 = arith.constant 0 : index
    %7 = vector.load %arg2[%c0_2, %c0_3, %c0_4] : memref<2x4x64xf32, #tpu.memory_space<vmem>>, vector<2x4x64xf32>
    %cst = arith.constant dense<0.000000e+00> : vector<2x64xf32>
    %8 = vector.multi_reduction <add>, %7, %cst [1] : vector<2x4x64xf32> to vector<2x64xf32>
    %cst_5 = arith.constant 2.500000e-01 : f32
    %9 = vector.broadcast %cst_5 : f32 to vector<2x64xf32>
    %10 = arith.mulf %8, %9 : vector<2x64xf32>
    %11 = arith.truncf %10 : vector<2x64xf32> to vector<2x64xbf16>
    %c0_6 = arith.constant 0 : index
    %c0_7 = arith.constant 0 : index
    %12 = vector.load %arg3[%c0_6, %c0_7] : memref<64x768xbf16, #tpu.memory_space<vmem>>, vector<64x768xbf16>
    %cst_8 = arith.constant dense<0.000000e+00> : vector<2x768xf32>
    %13 = tpu.matmul %11, %12, %cst_8 {dimension_numbers = #tpu.dot_dimension_numbers<[1], [0], [0], [1], [0, 0, 1, 1], [], []>} : vector<2x64xbf16>, vector<64x768xbf16>, vector<2x768xf32> -> vector<2x768xf32>
    %14 = arith.addf %6, %13 : vector<2x768xf32>
    %15 = math.tanh %14 : vector<2x768xf32>
    %16 = arith.truncf %15 : vector<2x768xf32> to vector<2x768xbf16>
    %c0_9 = arith.constant 0 : index
    %c0_10 = arith.constant 0 : index
    %17 = vector.load %arg4[%c0_9, %c0_10] : memref<8x768xbf16, #tpu.memory_space<vmem>>, vector<8x768xbf16>
    %cst_11 = arith.constant dense<0.000000e+00> : vector<2x8xf32>
    %18 = tpu.matmul %16, %17, %cst_11 {dimension_numbers = #tpu.dot_dimension_numbers<[1], [1], [0], [0], [0, 0, 1, 0], [], []>} : vector<2x768xbf16>, vector<8x768xbf16>, vector<2x8xf32> -> vector<2x8xf32>
    %c0_12 = arith.constant 0 : index
    %c0_13 = arith.constant 0 : index
    %19 = vector.load %arg5[%c0_12, %c0_13] : memref<1x8xf32, #tpu.memory_space<vmem>>, vector<1x8xf32>
    %20 = vector.broadcast %19 : vector<1x8xf32> to vector<2x8xf32>
    %21 = arith.addf %18, %20 : vector<2x8xf32>
    %c0_14 = arith.constant 0 : index
    %c0_15 = arith.constant 0 : index
    %22 = vector.load %arg6[%c0_14, %c0_15] : memref<2x8xf32, #tpu.memory_space<vmem>>, vector<2x8xf32>
    tpu.vector_store %arg6[%c0_14, %c0_15], %21 {strides = array<i32>} : memref<2x8xf32, #tpu.memory_space<vmem>>, vector<2x8xf32>,
    return
  }
}

</mosaic_0001>

<llo_original>
// kernel: tpu_custom_call.1
$region0: #{tpu_custom_call.1}
  #allocation0 [shape = 'u32[]', space=smem, size = 0x4, offset = 0x4, fixed_abs, tag = 'smem constant byte address 0x4 - core index']
  #allocation1 [shape = 'u32[144,128]{1,0:T(1,128)}', space=vmem, size = 0x12000, scoped, tag = 'internal scratch']
  %s0 = inlined_call_operand.hbm [shape: s32[2], index: 0, kind: input, shape index: {}]
  %s1 = inlined_call_operand.hbm [shape: f32[32,768], index: 1, kind: input, shape index: {}]
  %s2 = inlined_call_operand.hbm [shape: f32[2,4,64], index: 2, kind: input, shape index: {}]
  %s3 = inlined_call_operand.hbm [shape: bf16[64,768], index: 3, kind: input, shape index: {}]
  %s4 = inlined_call_operand.hbm [shape: bf16[8,768], index: 4, kind: input, shape index: {}]
  %s5 = inlined_call_operand.vmem [shape: f32[1,8], index: 5, kind: input, shape index: {}]
  %s6 = inlined_call_operand.hbm [shape: f32[2,8], index: 6, kind: output, shape index: {}]
  %s7 = sld [smem:[#allocation0]]
  $region54: #{tpu_custom_call.1} parent=0
    _
  %s9 = ssub.s32 1, %s7
  %s10 = scalar_select 0, %s9, %s7
  $region1: #{tpu_custom_call.1} parent=0
    #allocation2 [shape = 'u8[512]{0}', space=smem, size = 0x200, scoped, tag = 'input window, operand 0, single buffered']
    #allocation3 [shape = 's32[1]{0}', space=sflag, size = 0x4, scoped, tag = 'scoped memory for tpu_custom_call.1']
    #allocation4 [shape = 's32[1]{0}', space=sflag, size = 0x4, scoped, tag = 'scoped memory for tpu_custom_call.1']
    #allocation5 [shape = 's32[1]{0}', space=sflag, size = 0x4, scoped, tag = 'scoped memory for tpu_custom_call.1']
    #allocation6 [shape = 'u8[98304]{0}', space=vmem, size = 0x18000, scoped, tag = 'input window, operand 1, single buffered']
    #allocation7 [shape = 'u8[4096]{0}', space=vmem, size = 0x1000, scoped, tag = 'input window, operand 2, single buffered']
    #allocation8 [shape = 's32[1]{0}', space=sflag, size = 0x4, scoped, tag = 'scoped memory for tpu_custom_call.1']
    #allocation9 [shape = 'u8[98304]{0}', space=vmem, size = 0x18000, scoped, tag = 'input window, operand 3, single buffered']
    #allocation10 [shape = 'u8[12288]{0}', space=vmem, size = 0x3000, scoped, tag = 'input window, operand 4, single buffered']
    #allocation11 [shape = 's32[1]{0}', space=sflag, size = 0x4, scoped, tag = 'scoped memory for tpu_custom_call.1']
    #allocation12 [shape = 'u8[1024]{0}', space=vmem, size = 0x400, scoped, tag = 'output window, operand 0, single buffered']
    %11 = vsyncpa [#allocation5], 0
    %12 = vsyncpa [#allocation3], 0
    %13 = vsyncpa [#allocation8], 0
    %14 = vsyncpa [#allocation11], 0
    %15 = vsyncpa [#allocation4], 0
    // Predicated region
    $region2: #{tpu_custom_call.1} parent=1 // pred_check
      _
    $region3: #{tpu_custom_call.1} parent=1 // pred_check_branch
      %17 = sbr.rel (0) target = $region5
    $region4: #{tpu_custom_call.1} parent=1 // pred_region
      %s19 = ssub.s32 16, 16
      %20 = vsyncadd [#allocation5], %s19
      %23 = dma.hbm_to_smem %s0, 16, [#allocation2], [#allocation5]
    $region5: #{tpu_custom_call.1} parent=1 // pred_fallthru
      _
    // Predicated region
    $region6: #{tpu_custom_call.1} parent=1 // pred_check
      _
    $region7: #{tpu_custom_call.1} parent=1 // pred_check_branch
      %25 = sbr.rel (0) target = $region9
    $region8: #{tpu_custom_call.1} parent=1 // pred_region
      %s27 = ssub.s32 3072, 3072
      %28 = vsyncadd [#allocation3], %s27
      %s29 = sshll.u32 [#allocation6], 4
      %s30 = int_to_ptr.vmem [resolvable:$true] %s29
      %35 = dma.hbm_to_vmem [thread:$0]  %s1, 3072, %s30, [#allocation3], 768, 768, 48
    $region9: #{tpu_custom_call.1} parent=1 // pred_fallthru
      _
    // Predicated region
    $region10: #{tpu_custom_call.1} parent=1 // pred_check
      _
    $region11: #{tpu_custom_call.1} parent=1 // pred_check_branch
      %37 = sbr.rel (0) target = $region13
    $region12: #{tpu_custom_call.1} parent=1 // pred_region
      %s39 = ssub.s32 128, 128
      %40 = vsyncadd [#allocation8], %s39
      %s41 = sshll.u32 [#allocation7], 4
      %s42 = int_to_ptr.vmem [resolvable:$true] %s41
      %47 = dma.hbm_to_vmem [thread:$0]  %s2, 128, %s42, [#allocation8], 64, 64, 4
    $region13: #{tpu_custom_call.1} parent=1 // pred_fallthru
      _
    // Predicated region
    $region14: #{tpu_custom_call.1} parent=1 // pred_check
      _
    $region15: #{tpu_custom_call.1} parent=1 // pred_check_branch
      %49 = sbr.rel (0) target = $region17
    $region16: #{tpu_custom_call.1} parent=1 // pred_region
      %s51 = ssub.s32 3072, 3072
      %52 = vsyncadd [#allocation8], %s51
      %s53 = sshll.u32 [#allocation9], 4
      %s54 = int_to_ptr.vmem [resolvable:$true] %s53
      %59 = dma.hbm_to_vmem [thread:$0]  %s3, 3072, %s54, [#allocation8], 384, 384, 24
    $region17: #{tpu_custom_call.1} parent=1 // pred_fallthru
      _
    // Predicated region
    $region18: #{tpu_custom_call.1} parent=1 // pred_check
      _
    $region19: #{tpu_custom_call.1} parent=1 // pred_check_branch
      %61 = sbr.rel (0) target = $region21
    $region20: #{tpu_custom_call.1} parent=1 // pred_region
      %s63 = ssub.s32 384, 384
      %64 = vsyncadd [#allocation11], %s63
      %s66 = sshll.u32 [#allocation10], 4
      %s67 = int_to_ptr.vmem [resolvable:$true] %s66
      %69 = dma.hbm_to_vmem [thread:$0]  %s4, 384, %s67, [#allocation11]
    $region21: #{tpu_custom_call.1} parent=1 // pred_fallthru
      _
    // Predicated region
    $region22: #{tpu_custom_call.1} parent=1 // pred_check
      _
    $region23: #{tpu_custom_call.1} parent=1 // pred_check_branch
      %71 = sbr.rel (0) target = $region25
    $region24: #{tpu_custom_call.1} parent=1 // pred_region
      _
    $region25: #{tpu_custom_call.1} parent=1 // pred_fallthru
      _
    // Predicated region
    $region26: #{tpu_custom_call.1} parent=1 // pred_check
      _
    $region27: #{tpu_custom_call.1} parent=1 // pred_check_branch
      %73 = sbr.rel (0) target = $region29
    $region28: #{tpu_custom_call.1} parent=1 // pred_region
      %74 = dma.done [#allocation5], 16
    $region29: #{tpu_custom_call.1} parent=1 // pred_fallthru
      _
    // Predicated region
    $region30: #{tpu_custom_call.1} parent=1 // pred_check
      _
    $region31: #{tpu_custom_call.1} parent=1 // pred_check_branch
      %76 = sbr.rel (0) target = $region33
    $region32: #{tpu_custom_call.1} parent=1 // pred_region
      %77 = dma.done [#allocation3], 3072
    $region33: #{tpu_custom_call.1} parent=1 // pred_fallthru
      _
    // Predicated region
    $region34: #{tpu_custom_call.1} parent=1 // pred_check
      _
    $region35: #{tpu_custom_call.1} parent=1 // pred_check_branch
      %79 = sbr.rel (0) target = $region37
    $region36: #{tpu_custom_call.1} parent=1 // pred_region
      %80 = dma.done [#allocation8], 128
    $region37: #{tpu_custom_call.1} parent=1 // pred_fallthru
      _
    // Predicated region
    $region38: #{tpu_custom_call.1} parent=1 // pred_check
      _
    $region39: #{tpu_custom_call.1} parent=1 // pred_check_branch
      %82 = sbr.rel (0) target = $region41
    $region40: #{tpu_custom_call.1} parent=1 // pred_region
      %83 = dma.done [#allocation8], 3072
    $region41: #{tpu_custom_call.1} parent=1 // pred_fallthru
      _
    // Predicated region
    $region42: #{tpu_custom_call.1} parent=1 // pred_check
      _
    $region43: #{tpu_custom_call.1} parent=1 // pred_check_branch
      %85 = sbr.rel (0) target = $region45
    $region44: #{tpu_custom_call.1} parent=1 // pred_region
      %86 = dma.done [#allocation11], 384
    $region45: #{tpu_custom_call.1} parent=1 // pred_fallthru
      _
    %87 = sfence
    %s89 = sld [smem:[#allocation2]]
    %s90 = sshra.s32 %s89, 3
    %s91 = sand.u32 %s89, 7
    %s92 = sshra.s32 %s89, 3
    %s93 = sand.u32 %s89, 7
    %s94 = smul.u32 %s90, 6
    %s95 = smul.u32 %s94, 8
    %s96 = sadd.s32 %s95, %s93
    %s97 = scalar_lea.vmem [#allocation6], %s96
    %v98 = vld [vmem:[%s97] ss:$8 sm:$0xf]
    %v99 = vld [vmem:[%s97] ss:$8 sm:$0x30]
    %v100 = vor.u32 %v98, %v99
    %s101 = sld [smem:[#allocation2 + $0x1]]
    %s102 = sshra.s32 %s101, 3
    %s103 = sand.u32 %s101, 7
    %s104 = sshra.s32 %s101, 3
    %s105 = sand.u32 %s101, 7
    %s106 = smul.u32 %s102, 6
    %s107 = smul.u32 %s106, 8
    %s108 = sadd.s32 %s107, %s105
    %s109 = scalar_lea.vmem [#allocation6], %s108
    %v110 = vld [vmem:[%s109] ss:$8 sm:$0xf]
    %v111 = vld [vmem:[%s109] ss:$8 sm:$0x30]
    %v112 = vor.u32 %v110, %v111
    %v114 = vlaneseq
    %v115 = vshrl.u32 %v114, 7
    %v116 = vsub.s32 0, %v115
    %v117 = vrot.slane %v100, %v116
    %v118 = vlaneseq
    %v119 = vshrl.u32 %v118, 7
    %v120 = vsub.s32 1, %v119
    %v121 = vrot.slane %v100, %v120
    %v122 = vlaneseq
    %v123 = vshrl.u32 %v122, 7
    %v124 = vsub.s32 2, %v123
    %v125 = vrot.slane %v100, %v124
    %v126 = vlaneseq
    %v127 = vshrl.u32 %v126, 7
    %v128 = vsub.s32 3, %v127
    %v129 = vrot.slane %v100, %v128
    %v130 = vlaneseq
    %v131 = vshrl.u32 %v130, 7
    %v132 = vsub.s32 4, %v131
    %v133 = vrot.slane %v100, %v132
    %v134 = vlaneseq
    %v135 = vshrl.u32 %v134, 7
    %v136 = vsub.s32 5, %v135
    %v137 = vrot.slane %v100, %v136
    %v145 = vlaneseq
    %v146 = vshrl.u32 %v145, 7
    %v147 = vsub.s32 0, %v146
    %v148 = vrot.slane %v112, %v147
    %v149 = vlaneseq
    %v150 = vshrl.u32 %v149, 7
    %v151 = vsub.s32 1, %v150
    %v152 = vrot.slane %v112, %v151
    %v153 = vlaneseq
    %v154 = vshrl.u32 %v153, 7
    %v155 = vsub.s32 2, %v154
    %v156 = vrot.slane %v112, %v155
    %v157 = vlaneseq
    %v158 = vshrl.u32 %v157, 7
    %v159 = vsub.s32 3, %v158
    %v160 = vrot.slane %v112, %v159
    %v161 = vlaneseq
    %v162 = vshrl.u32 %v161, 7
    %v163 = vsub.s32 4, %v162
    %v164 = vrot.slane %v112, %v163
    %v165 = vlaneseq
    %v166 = vshrl.u32 %v165, 7
    %v167 = vsub.s32 5, %v166
    %v168 = vrot.slane %v112, %v167
    %vm175 = vcmask 1040384
    %v176 = vsel %vm175, %v117, %v148
    %v177 = vsel %vm175, %v121, %v152
    %v178 = vsel %vm175, %v125, %v156
    %v179 = vsel %vm175, %v129, %v160
    %v180 = vsel %vm175, %v133, %v164
    %v181 = vsel %vm175, %v137, %v168
    %v182 = vld [vmem:[#allocation7] sm:$0xf]
    %v183 = vld [vmem:[#allocation7 + $0x4] sm:$0xf]
    %vm184 = vcmask 519168
    %v185 = vsel %vm184, %v182, 0.0
    %v186 = vrot.slane %v185, 4
    %v187 = vadd.f32 %v185, %v186
    %v188 = vrot.slane %v187, 2
    %v189 = vadd.f32 %v187, %v188
    %v190 = vrot.slane %v189, 1
    %v191 = vadd.f32 %v189, %v190
    %v192 = vsel %vm184, %v183, 0.0
    %v193 = vrot.slane %v192, 4
    %v194 = vadd.f32 %v192, %v193
    %v195 = vrot.slane %v194, 2
    %v196 = vadd.f32 %v194, %v195
    %v197 = vrot.slane %v196, 1
    %v198 = vadd.f32 %v196, %v197
    %v199 = vmul.f32 %v191, 0.25
    %v200 = vmul.f32 %v198, 0.25
    %v201 = vpack.c.bf16 %v199, %v199
    %v202 = vpack.c.bf16 %v200, %v200
    %v203 = vld [vmem:[#allocation9] sm:$0xff]
    %v204 = vld [vmem:[#allocation9 + $0x8] sm:$0xff]
    %v205 = vld [vmem:[#allocation9 + $0x10] sm:$0xff]
    %v206 = vld [vmem:[#allocation9 + $0x18] sm:$0xff]
    %v207 = vld [vmem:[#allocation9 + $0x20] sm:$0xff]
    %v208 = vld [vmem:[#allocation9 + $0x28] sm:$0xff]
    %v209 = vld [vmem:[#allocation9 + $0x30] sm:$0xff]
    %v210 = vld [vmem:[#allocation9 + $0x38] sm:$0xff]
    %v211 = vld [vmem:[#allocation9 + $0x40] sm:$0xff]
    %v212 = vld [vmem:[#allocation9 + $0x48] sm:$0xff]
    %v213 = vld [vmem:[#allocation9 + $0x50] sm:$0xff]
    %v214 = vld [vmem:[#allocation9 + $0x58] sm:$0xff]
    %v215 = vld [vmem:[#allocation9 + $0x60] sm:$0xff]
    %v216 = vld [vmem:[#allocation9 + $0x68] sm:$0xff]
    %v217 = vld [vmem:[#allocation9 + $0x70] sm:$0xff]
    %v218 = vld [vmem:[#allocation9 + $0x78] sm:$0xff]
    %v219 = vld [vmem:[#allocation9 + $0x80] sm:$0xff]
    %v220 = vld [vmem:[#allocation9 + $0x88] sm:$0xff]
    %v221 = vld [vmem:[#allocation9 + $0x90] sm:$0xff]
    %v222 = vld [vmem:[#allocation9 + $0x98] sm:$0xff]
    %v223 = vld [vmem:[#allocation9 + $0xa0] sm:$0xff]
    %v224 = vld [vmem:[#allocation9 + $0xa8] sm:$0xff]
    %v225 = vld [vmem:[#allocation9 + $0xb0] sm:$0xff]
    %v226 = vld [vmem:[#allocation9 + $0xb8] sm:$0xff]
    %v229 = vunpack.c.l.b16 %v201
    %v230 = vunpack.c.l.b16 %v202
    %vm231 = vcmask 1041409
    %v232 = vsel %vm231, %v230, %v229
    %v233 = vpack.c.b16 %v232, %v232
    %v258 = vunpack.c.l.b16 %v203
    %v259 = vunpack.c.h.b16 %v203
    %v260 = vunpack.c.l.b16 %v204
    %v261 = vunpack.c.h.b16 %v204
    %v262 = vunpack.c.l.b16 %v205
    %v263 = vunpack.c.h.b16 %v205
    %v264 = vunpack.c.l.b16 %v206
    %v265 = vunpack.c.h.b16 %v206
    %v266 = vunpack.c.l.b16 %v207
    %v267 = vunpack.c.h.b16 %v207
    %v268 = vunpack.c.l.b16 %v208
    %v269 = vunpack.c.h.b16 %v208
    %v270 = vunpack.c.l.b16 %v209
    %v271 = vunpack.c.h.b16 %v209
    %v272 = vunpack.c.l.b16 %v210
    %v273 = vunpack.c.h.b16 %v210
    %v274 = vunpack.c.l.b16 %v211
    %v275 = vunpack.c.h.b16 %v211
    %v276 = vunpack.c.l.b16 %v212
    %v277 = vunpack.c.h.b16 %v212
    %v278 = vunpack.c.l.b16 %v213
    %v279 = vunpack.c.h.b16 %v213
    %v280 = vunpack.c.l.b16 %v214
    %v281 = vunpack.c.h.b16 %v214
    %v282 = vunpack.c.l.b16 %v215
    %v283 = vunpack.c.h.b16 %v215
    %v284 = vunpack.c.l.b16 %v216
    %v285 = vunpack.c.h.b16 %v216
    %v286 = vunpack.c.l.b16 %v217
    %v287 = vunpack.c.h.b16 %v217
    %v288 = vunpack.c.l.b16 %v218
    %v289 = vunpack.c.h.b16 %v218
    %v290 = vunpack.c.l.b16 %v219
    %v291 = vunpack.c.h.b16 %v219
    %v292 = vunpack.c.l.b16 %v220
    %v293 = vunpack.c.h.b16 %v220
    %v294 = vunpack.c.l.b16 %v221
    %v295 = vunpack.c.h.b16 %v221
    %v296 = vunpack.c.l.b16 %v222
    %v297 = vunpack.c.h.b16 %v222
    %v298 = vunpack.c.l.b16 %v223
    %v299 = vunpack.c.h.b16 %v223
    %v300 = vunpack.c.l.b16 %v224
    %v301 = vunpack.c.h.b16 %v224
    %v302 = vunpack.c.l.b16 %v225
    %v303 = vunpack.c.h.b16 %v225
    %v304 = vunpack.c.l.b16 %v226
    %v305 = vunpack.c.h.b16 %v226
    %v306 = vpack.c.b16 %v264, %v258
    %v307 = vpack.c.b16 %v265, %v259
    %v308 = vpack.c.b16 %v266, %v260
    %v309 = vpack.c.b16 %v267, %v261
    %v310 = vpack.c.b16 %v268, %v262
    %v311 = vpack.c.b16 %v269, %v263
    %v312 = vpack.c.b16 %v276, %v270
    %v313 = vpack.c.b16 %v277, %v271
    %v314 = vpack.c.b16 %v278, %v272
    %v315 = vpack.c.b16 %v279, %v273
    %v316 = vpack.c.b16 %v280, %v274
    %v317 = vpack.c.b16 %v281, %v275
    %v318 = vpack.c.b16 %v288, %v282
    %v319 = vpack.c.b16 %v289, %v283
    %v320 = vpack.c.b16 %v290, %v284
    %v321 = vpack.c.b16 %v291, %v285
    %v322 = vpack.c.b16 %v292, %v286
    %v323 = vpack.c.b16 %v293, %v287
    %v324 = vpack.c.b16 %v300, %v294
    %v325 = vpack.c.b16 %v301, %v295
    %v326 = vpack.c.b16 %v302, %v296
    %v327 = vpack.c.b16 %v303, %v297
    %v328 = vpack.c.b16 %v304, %v298
    %v329 = vpack.c.b16 %v305, %v299
    %vm354 = vcmask 523264
    %v356 = vsel %vm354, %v233, 0
    %358 = vmatprep.subr.bf16.mxu0 %v307
    %359 = vmatpush1.bf16.msra.mxu0 %v306
    %360 = vmatprep.subr.bf16.mxu0 %v313
    %361 = vmatpush1.bf16.msra.mxu0 %v312
    %362 = vmatprep.subr.bf16.mxu0 %v319
    %363 = vmatpush1.bf16.msra.mxu0 %v318
    %364 = vmatprep.subr.bf16.mxu0 %v325
    %365 = vmatpush1.bf16.msra.mxu0 %v324
    %366 = vmatprep.subr.bf16.mxu0 0
    %367 = vmatpush1.bf16.msra.mxu0 0
    %368 = vmatprep.subr.bf16.mxu0 0
    %369 = vmatpush1.bf16.msra.mxu0 0
    %370 = vmatprep.subr.bf16.mxu0 0
    %371 = vmatpush1.bf16.msra.mxu0 0
    %372 = vmatprep.subr.bf16.mxu0 0
    %373 = vmatpush1.bf16.msra.mxu0 0
    %374 = vmatprep.subr.bf16.mxu0 0
    %375 = vmatpush1.bf16.msra.mxu0 0
    %376 = vmatprep.subr.bf16.mxu0 0
    %377 = vmatpush1.bf16.msra.mxu0 0
    %378 = vmatprep.subr.bf16.mxu0 0
    %379 = vmatpush1.bf16.msra.mxu0 0
    %380 = vmatprep.subr.bf16.mxu0 0
    %381 = vmatpush1.bf16.msra.mxu0 0
    %382 = vmatprep.subr.bf16.mxu0 0
    %383 = vmatpush1.bf16.msra.mxu0 0
    %384 = vmatprep.subr.bf16.mxu0 0
    %385 = vmatpush1.bf16.msra.mxu0 0
    %386 = vmatprep.subr.bf16.mxu0 0
    %387 = vmatpush1.bf16.msra.mxu0 0
    %388 = vmatprep.subr.bf16.mxu0 0
    %389 = vmatpush1.bf16.msra.mxu0 0
    %390 = vmatprep.mubr.bf16.mxu0 0
    %391 = vmatmul.mubr.bf16.gmra.mrb[0].mxu0 %v356
    %v392 = vpop.f32.mrb[0].mxu0
    %v393 = vadd.f32 0.0, %v392
    %v394 = vpop.f32.mrb[0].mxu0
    %v395 = vadd.f32 0.0, %v394
    %v396 = vpop.f32.mrb[0].mxu0
    %v397 = vpop.f32.mrb[0].mxu0
    %398 = vdwg.mxu0
    %399 = vmatprep.subr.bf16.mxu0 %v309
    %400 = vmatpush1.bf16.msra.mxu0 %v308
    %401 = vmatprep.subr.bf16.mxu0 %v315
    %402 = vmatpush1.bf16.msra.mxu0 %v314
    %403 = vmatprep.subr.bf16.mxu0 %v321
    %404 = vmatpush1.bf16.msra.mxu0 %v320
    %405 = vmatprep.subr.bf16.mxu0 %v327
    %406 = vmatpush1.bf16.msra.mxu0 %v326
    %407 = vmatprep.subr.bf16.mxu0 0
    %408 = vmatpush1.bf16.msra.mxu0 0
    %409 = vmatprep.subr.bf16.mxu0 0
    %410 = vmatpush1.bf16.msra.mxu0 0
    %411 = vmatprep.subr.bf16.mxu0 0
    %412 = vmatpush1.bf16.msra.mxu0 0
    %413 = vmatprep.subr.bf16.mxu0 0
    %414 = vmatpush1.bf16.msra.mxu0 0
    %415 = vmatprep.subr.bf16.mxu0 0
    %416 = vmatpush1.bf16.msra.mxu0 0
    %417 = vmatprep.subr.bf16.mxu0 0
    %418 = vmatpush1.bf16.msra.mxu0 0
    %419 = vmatprep.subr.bf16.mxu0 0
    %420 = vmatpush1.bf16.msra.mxu0 0
    %421 = vmatprep.subr.bf16.mxu0 0
    %422 = vmatpush1.bf16.msra.mxu0 0
    %423 = vmatprep.subr.bf16.mxu0 0
    %424 = vmatpush1.bf16.msra.mxu0 0
    %425 = vmatprep.subr.bf16.mxu0 0
    %426 = vmatpush1.bf16.msra.mxu0 0
    %427 = vmatprep.subr.bf16.mxu0 0
    %428 = vmatpush1.bf16.msra.mxu0 0
    %429 = vmatprep.subr.bf16.mxu0 0
    %430 = vmatpush1.bf16.msra.mxu0 0
    %431 = vmatprep.mubr.bf16.mxu0 0
    %432 = vmatmul.mubr.bf16.gmra.mrb[0].mxu0 %v356
    %v433 = vpop.f32.mrb[0].mxu0
    %v434 = vadd.f32 0.0, %v433
    %v435 = vpop.f32.mrb[0].mxu0
    %v436 = vadd.f32 0.0, %v435
    %v437 = vpop.f32.mrb[0].mxu0
    %v438 = vpop.f32.mrb[0].mxu0
    %439 = vdwg.mxu0
    %440 = vmatprep.subr.bf16.mxu0 %v311
    %441 = vmatpush1.bf16.msra.mxu0 %v310
    %442 = vmatprep.subr.bf16.mxu0 %v317
    %443 = vmatpush1.bf16.msra.mxu0 %v316
    %444 = vmatprep.subr.bf16.mxu0 %v323
    %445 = vmatpush1.bf16.msra.mxu0 %v322
    %446 = vmatprep.subr.bf16.mxu0 %v329
    %447 = vmatpush1.bf16.msra.mxu0 %v328
    %448 = vmatprep.subr.bf16.mxu0 0
    %449 = vmatpush1.bf16.msra.mxu0 0
    %450 = vmatprep.subr.bf16.mxu0 0
    %451 = vmatpush1.bf16.msra.mxu0 0
    %452 = vmatprep.subr.bf16.mxu0 0
    %453 = vmatpush1.bf16.msra.mxu0 0
    %454 = vmatprep.subr.bf16.mxu0 0
    %455 = vmatpush1.bf16.msra.mxu0 0
    %456 = vmatprep.subr.bf16.mxu0 0
    %457 = vmatpush1.bf16.msra.mxu0 0
    %458 = vmatprep.subr.bf16.mxu0 0
    %459 = vmatpush1.bf16.msra.mxu0 0
    %460 = vmatprep.subr.bf16.mxu0 0
    %461 = vmatpush1.bf16.msra.mxu0 0
    %462 = vmatprep.subr.bf16.mxu0 0
    %463 = vmatpush1.bf16.msra.mxu0 0
    %464 = vmatprep.subr.bf16.mxu0 0
    %465 = vmatpush1.bf16.msra.mxu0 0
    %466 = vmatprep.subr.bf16.mxu0 0
    %467 = vmatpush1.bf16.msra.mxu0 0
    %468 = vmatprep.subr.bf16.mxu0 0
    %469 = vmatpush1.bf16.msra.mxu0 0
    %470 = vmatprep.subr.bf16.mxu0 0
    %471 = vmatpush1.bf16.msra.mxu0 0
    %472 = vmatprep.mubr.bf16.mxu0 0
    %473 = vmatmul.mubr.bf16.gmra.mrb[0].mxu0 %v356
    %v474 = vpop.f32.mrb[0].mxu0
    %v475 = vadd.f32 0.0, %v474
    %v476 = vpop.f32.mrb[0].mxu0
    %v477 = vadd.f32 0.0, %v476
    %v478 = vpop.f32.mrb[0].mxu0
    %v479 = vpop.f32.mrb[0].mxu0
    %480 = vdwg.mxu0
    %v481 = vadd.f32 %v176, %v393
    %v482 = vadd.f32 %v177, %v395
    %v483 = vadd.f32 %v178, %v434
    %v484 = vadd.f32 %v179, %v436
    %v485 = vadd.f32 %v180, %v475
    %v486 = vadd.f32 %v181, %v477
    %v487 = vtanh.pop %v481
    %v488 = vtanh.pop %v482
    %v489 = vtanh.pop %v483
    %v490 = vtanh.pop %v484
    %v491 = vtanh.pop %v485
    %v492 = vtanh.pop %v486
    %v493 = vpack.c.bf16 %v487, %v487
    %v494 = vpack.c.bf16 %v488, %v488
    %v495 = vpack.c.bf16 %v489, %v489
    %v496 = vpack.c.bf16 %v490, %v490
    %v497 = vpack.c.bf16 %v491, %v491
    %v498 = vpack.c.bf16 %v492, %v492
    %v499 = vld [vmem:[#allocation10] sm:$0xff]
    %v500 = vld [vmem:[#allocation10 + $0x8] sm:$0xff]
    %v501 = vld [vmem:[#allocation10 + $0x10] sm:$0xff]
    %v502 = vld [vmem:[%s5] sm:$0x1]
    %v504 = vlaneseq
    %v505 = vshrl.u32 %v504, 7
    %v506 = vsub.s32 0, %v505
    %v507 = vrot.slane %v502, %v506
    %v512 = vunpack.c.l.b16 %v499
    %v513 = vunpack.c.h.b16 %v499
    %v514 = vunpack.c.l.b16 %v500
    %v515 = vunpack.c.h.b16 %v500
    %v516 = vunpack.c.l.b16 %v501
    %v517 = vunpack.c.h.b16 %v501
    %v518 = vpack.c.b16 %v512, %v512
    %v519 = vpack.c.b16 %v513, %v513
    %v520 = vpack.c.b16 %v514, %v514
    %v521 = vpack.c.b16 %v515, %v515
    %v522 = vpack.c.b16 %v516, %v516
    %v523 = vpack.c.b16 %v517, %v517
    %530 = vmatprep.subr.bf16.mxu0 %v519
    %531 = vmatpush1.bf16.xpose.msra.mxu0 %v518
    %532 = vmatprep.subr.bf16.mxu0 0
    %533 = vmatpush1.bf16.xpose.msra.mxu0 0
    %534 = vmatprep.subr.bf16.mxu0 0
    %535 = vmatpush1.bf16.xpose.msra.mxu0 0
    %536 = vmatprep.subr.bf16.mxu0 0
    %537 = vmatpush1.bf16.xpose.msra.mxu0 0
    %538 = vmatprep.subr.bf16.mxu0 0
    %539 = vmatpush1.bf16.xpose.msra.mxu0 0
    %540 = vmatprep.subr.bf16.mxu0 0
    %541 = vmatpush1.bf16.xpose.msra.mxu0 0
    %542 = vmatprep.subr.bf16.mxu0 0
    %543 = vmatpush1.bf16.xpose.msra.mxu0 0
    %544 = vmatprep.subr.bf16.mxu0 0
    %545 = vmatpush1.bf16.xpose.msra.mxu0 0
    %546 = vmatprep.subr.bf16.mxu0 0
    %547 = vmatpush1.bf16.xpose.msra.mxu0 0
    %548 = vmatprep.subr.bf16.mxu0 0
    %549 = vmatpush1.bf16.xpose.msra.mxu0 0
    %550 = vmatprep.subr.bf16.mxu0 0
    %551 = vmatpush1.bf16.xpose.msra.mxu0 0
    %552 = vmatprep.subr.bf16.mxu0 0
    %553 = vmatpush1.bf16.xpose.msra.mxu0 0
    %554 = vmatprep.subr.bf16.mxu0 0
    %555 = vmatpush1.bf16.xpose.msra.mxu0 0
    %556 = vmatprep.subr.bf16.mxu0 0
    %557 = vmatpush1.bf16.xpose.msra.mxu0 0
    %558 = vmatprep.subr.bf16.mxu0 0
    %559 = vmatpush1.bf16.xpose.msra.mxu0 0
    %560 = vmatprep.subr.bf16.mxu0 0
    %561 = vmatpush1.bf16.xpose.msra.mxu0 0
    %562 = vmatprep.mubr.bf16.mxu0 %v494
    %563 = vmatmul.mubr.bf16.gmra.mrb[0].mxu0 %v493
    %v564 = vpop.f32.mrb[0].mxu0
    %v565 = vadd.f32 %v507, %v564
    %v566 = vpop.f32.mrb[0].mxu0
    %v567 = vpop.f32.mrb[0].mxu0
    %v568 = vpop.f32.mrb[0].mxu0
    %569 = vdwg.mxu0
    %570 = vmatprep.subr.bf16.mxu0 %v521
    %571 = vmatpush1.bf16.xpose.msra.mxu0 %v520
    %572 = vmatprep.subr.bf16.mxu0 0
    %573 = vmatpush1.bf16.xpose.msra.mxu0 0
    %574 = vmatprep.subr.bf16.mxu0 0
    %575 = vmatpush1.bf16.xpose.msra.mxu0 0
    %576 = vmatprep.subr.bf16.mxu0 0
    %577 = vmatpush1.bf16.xpose.msra.mxu0 0
    %578 = vmatprep.subr.bf16.mxu0 0
    %579 = vmatpush1.bf16.xpose.msra.mxu0 0
    %580 = vmatprep.subr.bf16.mxu0 0
    %581 = vmatpush1.bf16.xpose.msra.mxu0 0
    %582 = vmatprep.subr.bf16.mxu0 0
    %583 = vmatpush1.bf16.xpose.msra.mxu0 0
    %584 = vmatprep.subr.bf16.mxu0 0
    %585 = vmatpush1.bf16.xpose.msra.mxu0 0
    %586 = vmatprep.subr.bf16.mxu0 0
    %587 = vmatpush1.bf16.xpose.msra.mxu0 0
    %588 = vmatprep.subr.bf16.mxu0 0
    %589 = vmatpush1.bf16.xpose.msra.mxu0 0
    %590 = vmatprep.subr.bf16.mxu0 0
    %591 = vmatpush1.bf16.xpose.msra.mxu0 0
    %592 = vmatprep.subr.bf16.mxu0 0
    %593 = vmatpush1.bf16.xpose.msra.mxu0 0
    %594 = vmatprep.subr.bf16.mxu0 0
    %595 = vmatpush1.bf16.xpose.msra.mxu0 0
    %596 = vmatprep.subr.bf16.mxu0 0
    %597 = vmatpush1.bf16.xpose.msra.mxu0 0
    %598 = vmatprep.subr.bf16.mxu0 0
    %599 = vmatpush1.bf16.xpose.msra.mxu0 0
    %600 = vmatprep.subr.bf16.mxu0 0
    %601 = vmatpush1.bf16.xpose.msra.mxu0 0
    %602 = vmatprep.mubr.bf16.mxu0 %v496
    %603 = vmatmul.mubr.bf16.gmra.mrb[0].mxu0 %v495
    %v604 = vpop.f32.mrb[0].mxu0
    %v605 = vadd.f32 %v565, %v604
    %v606 = vpop.f32.mrb[0].mxu0
    %v607 = vpop.f32.mrb[0].mxu0
    %v608 = vpop.f32.mrb[0].mxu0
    %609 = vdwg.mxu0
    %610 = vmatprep.subr.bf16.mxu0 %v523
    %611 = vmatpush1.bf16.xpose.msra.mxu0 %v522
    %612 = vmatprep.subr.bf16.mxu0 0
    %613 = vmatpush1.bf16.xpose.msra.mxu0 0
    %614 = vmatprep.subr.bf16.mxu0 0
    %615 = vmatpush1.bf16.xpose.msra.mxu0 0
    %616 = vmatprep.subr.bf16.mxu0 0
    %617 = vmatpush1.bf16.xpose.msra.mxu0 0
    %618 = vmatprep.subr.bf16.mxu0 0
    %619 = vmatpush1.bf16.xpose.msra.mxu0 0
    %620 = vmatprep.subr.bf16.mxu0 0
    %621 = vmatpush1.bf16.xpose.msra.mxu0 0
    %622 = vmatprep.subr.bf16.mxu0 0
    %623 = vmatpush1.bf16.xpose.msra.mxu0 0
    %624 = vmatprep.subr.bf16.mxu0 0
    %625 = vmatpush1.bf16.xpose.msra.mxu0 0
    %626 = vmatprep.subr.bf16.mxu0 0
    %627 = vmatpush1.bf16.xpose.msra.mxu0 0
    %628 = vmatprep.subr.bf16.mxu0 0
    %629 = vmatpush1.bf16.xpose.msra.mxu0 0
    %630 = vmatprep.subr.bf16.mxu0 0
    %631 = vmatpush1.bf16.xpose.msra.mxu0 0
    %632 = vmatprep.subr.bf16.mxu0 0
    %633 = vmatpush1.bf16.xpose.msra.mxu0 0
    %634 = vmatprep.subr.bf16.mxu0 0
    %635 = vmatpush1.bf16.xpose.msra.mxu0 0
    %636 = vmatprep.subr.bf16.mxu0 0
    %637 = vmatpush1.bf16.xpose.msra.mxu0 0
    %638 = vmatprep.subr.bf16.mxu0 0
    %639 = vmatpush1.bf16.xpose.msra.mxu0 0
    %640 = vmatprep.subr.bf16.mxu0 0
    %641 = vmatpush1.bf16.xpose.msra.mxu0 0
    %642 = vmatprep.mubr.bf16.mxu0 %v498
    %643 = vmatmul.mubr.bf16.gmra.mrb[0].mxu0 %v497
    %v644 = vpop.f32.mrb[0].mxu0
    %v645 = vadd.f32 %v605, %v644
    %v646 = vpop.f32.mrb[0].mxu0
    %v647 = vpop.f32.mrb[0].mxu0
    %v648 = vpop.f32.mrb[0].mxu0
    %649 = vdwg.mxu0
    %vm650 = vcmask 58368
    %651 = vst.msk [vmem:[#allocation12] sm:$0x3] %vm650, %v645
    // Predicated region
    $region46: #{tpu_custom_call.1} parent=1 // pred_check
      _
    $region47: #{tpu_custom_call.1} parent=1 // pred_check_branch
      %653 = sbr.rel (0) target = $region49
    $region48: #{tpu_custom_call.1} parent=1 // pred_region
      %s655 = ssub.s32 32, 32
      %656 = vsyncadd [#allocation4], %s655
      %s658 = sshll.u32 [#allocation12], 4
      %s659 = int_to_ptr.vmem [resolvable:$true] %s658
      %661 = dma.vmem_to_hbm [thread:$0]  %s659, 32, %s6, [#allocation4]
    $region49: #{tpu_custom_call.1} parent=1 // pred_fallthru
      _
    // Predicated region
    $region50: #{tpu_custom_call.1} parent=1 // pred_check
      _
    $region51: #{tpu_custom_call.1} parent=1 // pred_check_branch
      %663 = sbr.rel (0) target = $region53
    $region52: #{tpu_custom_call.1} parent=1 // pred_region
      %664 = dma.done [#allocation4], 32
    $region53: #{tpu_custom_call.1} parent=1 // pred_fallthru
      _
    %665 = vsyncpa [#allocation3], 1
    %666 = vsyncpa [#allocation8], 1
    %667 = vsyncpa [#allocation11], 1
    %668 = vsyncpa [#allocation4], 1
    %669 = vsyncpa [#allocation5], 1

</llo_original>
